<compile_context>
chip_gen: v5e
topology: v5e:2x2
jax: 0.10.0
libtpu: 0.0.40
codegen_flags: <defaults>
</compile_context>

<pallas_src>
import math
from functools import partial

import jax
import jax.numpy as jnp
from jax.experimental import pallas as pl
from jax.experimental.pallas import tpu as pltpu

_VMEM_LIMIT = 64 * 1024 * 1024   # safe on v7x (64 MiB physical), lifts 32 MiB default


# ----------------------------------------------------------------------------
# Pallas kernels
# ----------------------------------------------------------------------------

def _mha_addnorm_kernel(q_ref, kv_ref, bias_ref,
                        wq_ref, bq_ref, wkv_ref, bkv_ref,
                        wo_ref, bo_ref, gamma_ref, beta_ref,
                        o_ref, ctx_ref, *, num_heads, eps):
    """Fused multi-head attention + out-proj + residual add + LayerNorm.

    Grid = (batch,).  Heads handled in-kernel: fused full-width projections,
    per-head attention, single output projection.
    """
    q = q_ref[0]                                     # (L, D) f32, also residual
    q_bf = q.astype(jnp.bfloat16)
    kv_bf = kv_ref[0].astype(jnp.bfloat16)

    D = q.shape[-1]
    dh = D // num_heads

    # Full-width fused projections (scale already folded into wq / bq).
    qp = jnp.dot(q_bf, wq_ref[...],
                 preferred_element_type=jnp.float32) + bq_ref[...]      # (L, D)
    kvp = jnp.dot(kv_bf, wkv_ref[...],
                  preferred_element_type=jnp.float32) + bkv_ref[...]    # (L, 2D)
    kp = kvp[:, :D]
    vp = kvp[:, D:]

    bias = bias_ref[...]                              # (L, L) additive mask bias

    # Per-head attention; each head writes its dh-wide slice of the context.
    for h in range(num_heads):
        sl = slice(h * dh, (h + 1) * dh)
        qh = qp[:, sl].astype(jnp.bfloat16)           # (L, dh)
        kh = kp[:, sl].astype(jnp.bfloat16)
        vh = vp[:, sl].astype(jnp.bfloat16)

        # q @ k^T without materializing a transpose (contract last dims).
        scores = jax.lax.dot_general(
            qh, kh, (((1,), (1,)), ((), ())),
            preferred_element_type=jnp.float32) + bias                  # (L, L)

        m = jnp.max(scores, axis=-1, keepdims=True)
        p = jnp.exp(scores - m)
        denom = jnp.sum(p, axis=-1, keepdims=True)
        p = p * pl.reciprocal(denom, approx=True)

        ctx_ref[:, sl] = jnp.dot(p.astype(jnp.bfloat16), vh,
                                 preferred_element_type=jnp.float32)    # (L, dh)

    # Single full-width output projection + residual + LayerNorm epilogue.
    attn = jnp.dot(ctx_ref[...].astype(jnp.bfloat16), wo_ref[...],
                   preferred_element_type=jnp.float32) + bo_ref[...]
    x = attn + q
    mean = jnp.mean(x, axis=-1, keepdims=True)
    var = jnp.mean((x - mean) ** 2, axis=-1, keepdims=True)
    y = (x - mean) * jax.lax.rsqrt(var + eps)
    o_ref[0] = (y * gamma_ref[...] + beta_ref[...]).astype(o_ref.dtype)


def _ffn_addnorm_kernel(x_ref, w1_ref, b1_ref, w2_ref, b2_ref,
                        gamma_ref, beta_ref, o_ref, *, eps):
    """Fused Linear -> ReLU -> Linear -> +residual -> LayerNorm on a row tile."""
    x = x_ref[...]                                   # (tm, D) f32
    h = jnp.dot(x.astype(jnp.bfloat16), w1_ref[...],
                preferred_element_type=jnp.float32) + b1_ref[...]
    h = jnp.maximum(h, 0.0)
    y = jnp.dot(h.astype(jnp.bfloat16), w2_ref[...],
                preferred_element_type=jnp.float32) + b2_ref[...]
    z = y + x                                        # residual is the input itself
    mean = jnp.mean(z, axis=-1, keepdims=True)
    var = jnp.mean((z - mean) ** 2, axis=-1, keepdims=True)
    o_ref[...] = (((z - mean) * jax.lax.rsqrt(var + eps)) * gamma_ref[...]
                  + beta_ref[...]).astype(o_ref.dtype)


def _linear_tiled_kernel(x_ref, w_ref, b_ref, o_ref):
    """Final vocab projection on a (row tile, vocab tile) block (V % 128 == 0)."""
    o_ref[...] = (jnp.dot(x_ref[...].astype(jnp.bfloat16), w_ref[...],
                          preferred_element_type=jnp.float32)
                  + b_ref[...]).astype(o_ref.dtype)


def _linear_pad_kernel(x_ref, w_ref, b_ref, o_ref):
    """Final vocab projection when V is not lane-aligned: compute on the
    lane-padded weight, store only the real V columns (no HBM re-slice)."""
    y = (jnp.dot(x_ref[...].astype(jnp.bfloat16), w_ref[...],
                 preferred_element_type=jnp.float32) + b_ref[...])
    v = o_ref.shape[-1]
    o_ref[...] = y[:, :v].astype(o_ref.dtype)


# ----------------------------------------------------------------------------
# Wrappers around pallas_call
# ----------------------------------------------------------------------------

def _row_tile(rows, max_tile=512):
    """Largest row tile <= max_tile that evenly divides `rows`."""
    if rows <= max_tile:
        return rows
    for t in (2048, 1024, 512, 256, 128, 64, 32, 16, 8):
        if t <= max_tile and rows % t == 0:
            return t
    return rows


def mha_add_norm(q, kv, mask, mha_prep, ln_p, num_heads, eps=1e-6):
    """LayerNorm(MHA(q, kv, kv, mask) + q) — fused single pallas_call."""
    B, L, D = q.shape

    # Additive mask bias (0 where attend, -1e9 where masked), tiny (L,L) array.
    bias = (mask.astype(jnp.float32) - 1.0) * 1e9

    act_spec = pl.BlockSpec((1, L, D), lambda b: (b, 0, 0))

    def const(r, c):
        return pl.BlockSpec((r, c), lambda b: (0, 0))

    return pl.pallas_call(
        partial(_mha_addnorm_kernel, num_heads=num_heads, eps=eps),
        out_shape=jax.ShapeDtypeStruct((B, L, D), q.dtype),
        grid=(B,),
        in_specs=[act_spec, act_spec,
                  const(L, L),
                  const(D, D), const(1, D),
                  const(D, 2 * D), const(1, 2 * D),
                  const(D, D), const(1, D),
                  const(1, D), const(1, D)],
        out_specs=act_spec,
        scratch_shapes=[pltpu.VMEM((L, D), jnp.float32)],
        compiler_params=pltpu.CompilerParams(
            dimension_semantics=("parallel",),
            vmem_limit_bytes=_VMEM_LIMIT),
    )(q, kv, bias,
      mha_prep["wq"], mha_prep["bq"], mha_prep["wkv"], mha_prep["bkv"],
      mha_prep["wo"], mha_prep["bo"], ln_p["gamma"], ln_p["beta"])


def ffn_add_norm(x, ffn_prep, ln_p, eps=1e-6):
    """LayerNorm(FFN(x) + x) — fused, tiled over rows."""
    B, L, D = x.shape
    rows = B * L
    tm = _row_tile(rows, 512)
    d_ff = ffn_prep["w1"].shape[1]
    x2 = x.reshape(rows, D)

    out = pl.pallas_call(
        partial(_ffn_addnorm_kernel, eps=eps),
        out_shape=jax.ShapeDtypeStruct((rows, D), x.dtype),
        grid=(rows // tm,),
        in_specs=[pl.BlockSpec((tm, D), lambda i: (i, 0)),
                  pl.BlockSpec((D, d_ff), lambda i: (0, 0)),
                  pl.BlockSpec((1, d_ff), lambda i: (0, 0)),
                  pl.BlockSpec((d_ff, D), lambda i: (0, 0)),
                  pl.BlockSpec((1, D), lambda i: (0, 0)),
                  pl.BlockSpec((1, D), lambda i: (0, 0)),
                  pl.BlockSpec((1, D), lambda i: (0, 0))],
        out_specs=pl.BlockSpec((tm, D), lambda i: (i, 0)),
        compiler_params=pltpu.CompilerParams(
            dimension_semantics=("parallel",),
            vmem_limit_bytes=_VMEM_LIMIT),
    )(x2, ffn_prep["w1"], ffn_prep["b1"], ffn_prep["w2"], ffn_prep["b2"],
      ln_p["gamma"], ln_p["beta"])
    return out.reshape(B, L, D)


def final_linear(x, out_prep):
    """Vocab projection. Weight is pre-padded/cast once in prepare_params."""
    B, L, D = x.shape
    rows = B * L
    w = out_prep["w"]              # (D, Vp) bf16
    b = out_prep["b"]              # (1, Vp) f32
    V = out_prep["V"]
    Vp = w.shape[1]
    x2 = x.reshape(rows, D)
    tm = _row_tile(rows, 1024)     # large row tiles -> fewer weight re-reads

    if V % 128 == 0:
        tn = 512 if Vp % 512 == 0 else (256 if Vp % 256 == 0 else 128)
        tn = min(tn, Vp)
        out = pl.pallas_call(
            _linear_tiled_kernel,
            out_shape=jax.ShapeDtypeStruct((rows, V), x.dtype),
            grid=(rows // tm, Vp // tn),
            in_specs=[pl.BlockSpec((tm, D), lambda i, j: (i, 0)),
                      pl.BlockSpec((D, tn), lambda i, j: (0, j)),
                      pl.BlockSpec((1, tn), lambda i, j: (0, j))],
            out_specs=pl.BlockSpec((tm, tn), lambda i, j: (i, j)),
            compiler_params=pltpu.CompilerParams(
                dimension_semantics=("parallel", "parallel"),
                vmem_limit_bytes=_VMEM_LIMIT),
        )(x2, w, b)
    else:
        # Non-aligned vocab: single vocab block, store only the real V columns.
        out = pl.pallas_call(
            _linear_pad_kernel,
            out_shape=jax.ShapeDtypeStruct((rows, V), x.dtype),
            grid=(rows // tm,),
            in_specs=[pl.BlockSpec((tm, D), lambda i: (i, 0)),
                      pl.BlockSpec((D, Vp), lambda i: (0, 0)),
                      pl.BlockSpec((1, Vp), lambda i: (0, 0))],
            out_specs=pl.BlockSpec((tm, V), lambda i: (i, 0)),
            compiler_params=pltpu.CompilerParams(
                dimension_semantics=("parallel",),
                vmem_limit_bytes=_VMEM_LIMIT),
        )(x2, w, b)
    return out.reshape(B, L, V)


# ----------------------------------------------------------------------------
# Parameter init / one-time prepare + full decoder forward (glue in plain JAX)
# ----------------------------------------------------------------------------

def sinusoidal_pe(seq_len, d_model):
    pos = jnp.arange(seq_len, dtype=jnp.float32)[:, None]
    i = jnp.arange(d_model, dtype=jnp.float32)[None, :]
    angle = pos / jnp.power(10000.0, (2.0 * jnp.floor(i / 2.0)) / d_model)
    pe = jnp.where((jnp.arange(d_model) % 2) == 0, jnp.sin(angle), jnp.cos(angle))
    return pe.astype(jnp.float32)                       # (L, D)


def init_params(key, d_model, num_heads, vocab_size, d_ff):
    ks = jax.random.split(key, 12)
    s = 0.02

    def w(k, shape):
        return jax.random.normal(k, shape, jnp.float32) * s

    return {
        "embedding": w(ks[0], (vocab_size, d_model)),
        "mha": {
            "wq": w(ks[1], (d_model, d_model)), "bq": jnp.zeros((1, d_model), jnp.float32),
            "wk": w(ks[2], (d_model, d_model)), "bk": jnp.zeros((1, d_model), jnp.float32),
            "wv": w(ks[3], (d_model, d_model)), "bv": jnp.zeros((1, d_model), jnp.float32),
            "wo": w(ks[4], (d_model, d_model)), "bo": jnp.zeros((1, d_model), jnp.float32),
        },
        "ln": {
            "gamma": jnp.ones((1, d_model), jnp.float32),
            "beta": jnp.zeros((1, d_model), jnp.float32),
        },
        "ffn": {
            "w1": w(ks[5], (d_model, d_ff)), "b1": jnp.zeros((1, d_ff), jnp.float32),
            "w2": w(ks[6], (d_ff, d_model)), "b2": jnp.zeros((1, d_model), jnp.float32),
        },
        "out": {
            "w": w(ks[7], (d_model, vocab_size)),
            "b": jnp.zeros((1, vocab_size), jnp.float32),
        },
    }


def prepare_params(params, num_heads):
    """One-time layout / dtype prep: bf16 casts, fused K/V weight, 1/sqrt(dh)
    scale folded into the Q projection, lane-padded vocab weight."""
    bf16 = jnp.bfloat16
    mha = params["mha"]
    D = mha["wq"].shape[0]
    dh = D // num_heads
    scale = 1.0 / math.sqrt(dh)

    w_out = params["out"]["w"]
    b_out = params["out"]["b"]
    V = w_out.shape[1]
    Vp = ((V + 127) // 128) * 128
    if Vp != V:
        w_out = jnp.pad(w_out, ((0, 0), (0, Vp - V)))
        b_out = jnp.pad(b_out, ((0, 0), (0, Vp - V)))

    return {
        "embedding": params["embedding"],
        "mha": {
            "wq": (mha["wq"] * scale).astype(bf16),                       # (D, D)
            "bq": mha["bq"] * scale,                                      # (1, D) f32
            "wkv": jnp.concatenate([mha["wk"], mha["wv"]], 1).astype(bf16),  # (D, 2D)
            "bkv": jnp.concatenate([mha["bk"], mha["bv"]], 1),            # (1, 2D) f32
            "wo": mha["wo"].astype(bf16),                                 # (D, D)
            "bo": mha["bo"],                                              # (1, D) f32
        },
        "ln": params["ln"],
        "ffn": {
            "w1": params["ffn"]["w1"].astype(bf16), "b1": params["ffn"]["b1"],
            "w2": params["ffn"]["w2"].astype(bf16), "b2": params["ffn"]["b2"],
        },
        "out": {"w": w_out.astype(bf16), "b": b_out, "V": V},
    }


def decoder_forward(prep, encoder_src, target, target_mask, target_pad_mask,
                    n, repeat_n, num_heads, d_model):
    if n == 0:
        emb = prep["embedding"][target]                 # (B, L, D) gather (glue)
        pe = sinusoidal_pe(target.shape[1], d_model)    # einsum('bc->cb') folded here
        emb = emb + pe[None, :, :]
    else:
        emb = target                                    # already (B, L, D)

    # dropout1..4 are identity in eval mode.
    # Mask assignment matches the PyTorch reference: target_mask on the
    # cross-attention (q=emb, k=v=encoder_src), target_pad_mask on self-attn.
    add_norm_1 = mha_add_norm(emb, encoder_src, target_mask,
                              prep["mha"], prep["ln"], num_heads)
    add_norm_2 = mha_add_norm(add_norm_1, add_norm_1, target_pad_mask,
                              prep["mha"], prep["ln"], num_heads)
    add_norm_3 = ffn_add_norm(add_norm_2, prep["ffn"], prep["ln"])

    if n == repeat_n - 1:
        return final_linear(add_norm_3, prep["out"])
    return add_norm_3


# ----------------------------------------------------------------------------

if __name__ == "__main__":
    B, L, D, H, V = 2, 8, 32, 4, 50        # batch, max_len, d_model, heads, vocab
    D_FF = 4 * D

    key = jax.random.PRNGKey(0)
    k_par, k_tgt, k_src = jax.random.split(key, 3)

    params = init_params(k_par, D, H, V, D_FF)
    prep = prepare_params(params, num_heads=H)          # one-time weight prep

    target = jax.random.randint(k_tgt, (B, L), 0, V, dtype=jnp.int32)
    encoder_src = jax.random.normal(k_src, (B, L, D), jnp.float32)

    # causal target mask; all-ones pad mask (1.0 = attend, 0.0 = masked)
    target_mask = jnp.tril(jnp.ones((L, L), jnp.float32))
    target_pad_mask = jnp.ones((L, L), jnp.float32)

    out = decoder_forward(prep, encoder_src, target, target_mask,
                          target_pad_mask, n=0, repeat_n=1,
                          num_heads=H, d_model=D)
    out = jax.block_until_ready(out)
    assert out.shape == (B, L, V), out.shape
    print("KERNEL_OK")
</pallas_src>

<mosaic_0001>
module attributes {stable_mosaic.version = 11 : i64} {
  func.func @_mha_addnorm_kernel(%arg0: i32, %arg1: memref<1x8x32xf32, #tpu.memory_space<vmem>>, %arg2: memref<1x8x32xf32, #tpu.memory_space<vmem>>, %arg3: memref<8x8xf32, #tpu.memory_space<vmem>>, %arg4: memref<32x32xbf16, #tpu.memory_space<vmem>>, %arg5: memref<1x32xf32, #tpu.memory_space<vmem>>, %arg6: memref<32x64xbf16, #tpu.memory_space<vmem>>, %arg7: memref<1x64xf32, #tpu.memory_space<vmem>>, %arg8: memref<32x32xbf16, #tpu.memory_space<vmem>>, %arg9: memref<1x32xf32, #tpu.memory_space<vmem>>, %arg10: memref<1x32xf32, #tpu.memory_space<vmem>>, %arg11: memref<1x32xf32, #tpu.memory_space<vmem>>, %arg12: memref<1x8x32xf32, #tpu.memory_space<vmem>>, %arg13: memref<8x32xf32, #tpu.memory_space<vmem>>) attributes {dimension_semantics = [#tpu.dimension_semantics<parallel>], iteration_bounds = array<i64: 2>, scalar_prefetch = 0 : i64, scratch_operands = 1 : i64, tpu.core_type = #tpu.core_type<tc>, window_params = [{transform_indices = @transform_0, window_bounds = array<i64: 1, 8, 32>}, {transform_indices = @transform_1, window_bounds = array<i64: 1, 8, 32>}, {pipeline_mode = #tpu.pipeline_mode<synchronous>, transform_indices = @transform_2, window_bounds = array<i64: 8, 8>}, {pipeline_mode = #tpu.pipeline_mode<synchronous>, transform_indices = @transform_3, window_bounds = array<i64: 32, 32>}, {pipeline_mode = #tpu.pipeline_mode<synchronous>, transform_indices = @transform_4, window_bounds = array<i64: 1, 32>}, {pipeline_mode = #tpu.pipeline_mode<synchronous>, transform_indices = @transform_5, window_bounds = array<i64: 32, 64>}, {pipeline_mode = #tpu.pipeline_mode<synchronous>, transform_indices = @transform_6, window_bounds = array<i64: 1, 64>}, {pipeline_mode = #tpu.pipeline_mode<synchronous>, transform_indices = @transform_7, window_bounds = array<i64: 32, 32>}, {pipeline_mode = #tpu.pipeline_mode<synchronous>, transform_indices = @transform_8, window_bounds = array<i64: 1, 32>}, {pipeline_mode = #tpu.pipeline_mode<synchronous>, transform_indices = @transform_9, window_bounds = array<i64: 1, 32>}, {pipeline_mode = #tpu.pipeline_mode<synchronous>, transform_indices = @transform_10, window_bounds = array<i64: 1, 32>}, {transform_indices = @transform_11, window_bounds = array<i64: 1, 8, 32>}]} {
    %c0 = arith.constant 0 : index
    %c0_0 = arith.constant 0 : index
    %c0_1 = arith.constant 0 : index
    %0 = vector.load %arg1[%c0, %c0_0, %c0_1] : memref<1x8x32xf32, #tpu.memory_space<vmem>>, vector<1x8x32xf32>
    %1 = vector.shape_cast %0 : vector<1x8x32xf32> to vector<8x32xf32>
    %2 = arith.truncf %1 : vector<8x32xf32> to vector<8x32xbf16>
    %c0_2 = arith.constant 0 : index
    %c0_3 = arith.constant 0 : index
    %c0_4 = arith.constant 0 : index
    %3 = vector.load %arg2[%c0_2, %c0_3, %c0_4] : memref<1x8x32xf32, #tpu.memory_space<vmem>>, vector<1x8x32xf32>
    %4 = vector.shape_cast %3 : vector<1x8x32xf32> to vector<8x32xf32>
    %5 = arith.truncf %4 : vector<8x32xf32> to vector<8x32xbf16>
    %c0_5 = arith.constant 0 : index
    %c0_6 = arith.constant 0 : index
    %6 = vector.load %arg4[%c0_5, %c0_6] : memref<32x32xbf16, #tpu.memory_space<vmem>>, vector<32x32xbf16>
    %cst = arith.constant dense<0.000000e+00> : vector<8x32xf32>
    %7 = tpu.matmul %2, %6, %cst {dimension_numbers = #tpu.dot_dimension_numbers<[1], [0], [0], [1], [0, 0, 1, 1], [], []>} : vector<8x32xbf16>, vector<32x32xbf16>, vector<8x32xf32> -> vector<8x32xf32>
    %c0_7 = arith.constant 0 : index
    %c0_8 = arith.constant 0 : index
    %8 = vector.load %arg5[%c0_7, %c0_8] : memref<1x32xf32, #tpu.memory_space<vmem>>, vector<1x32xf32>
    %9 = vector.broadcast %8 : vector<1x32xf32> to vector<8x32xf32>
    %10 = arith.addf %7, %9 : vector<8x32xf32>
    %c0_9 = arith.constant 0 : index
    %c0_10 = arith.constant 0 : index
    %11 = vector.load %arg6[%c0_9, %c0_10] : memref<32x64xbf16, #tpu.memory_space<vmem>>, vector<32x64xbf16>
    %cst_11 = arith.constant dense<0.000000e+00> : vector<8x64xf32>
    %12 = tpu.matmul %5, %11, %cst_11 {dimension_numbers = #tpu.dot_dimension_numbers<[1], [0], [0], [1], [0, 0, 1, 1], [], []>} : vector<8x32xbf16>, vector<32x64xbf16>, vector<8x64xf32> -> vector<8x64xf32>
    %c0_12 = arith.constant 0 : index
    %c0_13 = arith.constant 0 : index
    %13 = vector.load %arg7[%c0_12, %c0_13] : memref<1x64xf32, #tpu.memory_space<vmem>>, vector<1x64xf32>
    %14 = vector.broadcast %13 : vector<1x64xf32> to vector<8x64xf32>
    %15 = arith.addf %12, %14 : vector<8x64xf32>
    %16 = vector.extract_strided_slice %15 {offsets = [0, 0], sizes = [8, 32], strides = [1, 1]} : vector<8x64xf32> to vector<8x32xf32>
    %17 = vector.extract_strided_slice %15 {offsets = [0, 32], sizes = [8, 32], strides = [1, 1]} : vector<8x64xf32> to vector<8x32xf32>
    %c0_14 = arith.constant 0 : index
    %c0_15 = arith.constant 0 : index
    %18 = vector.load %arg3[%c0_14, %c0_15] : memref<8x8xf32, #tpu.memory_space<vmem>>, vector<8x8xf32>
    %19 = vector.extract_strided_slice %10 {offsets = [0, 0], sizes = [8, 8], strides = [1, 1]} : vector<8x32xf32> to vector<8x8xf32>
    %20 = arith.truncf %19 : vector<8x8xf32> to vector<8x8xbf16>
    %21 = vector.extract_strided_slice %16 {offsets = [0, 0], sizes = [8, 8], strides = [1, 1]} : vector<8x32xf32> to vector<8x8xf32>
    %22 = arith.truncf %21 : vector<8x8xf32> to vector<8x8xbf16>
    %23 = vector.extract_strided_slice %17 {offsets = [0, 0], sizes = [8, 8], strides = [1, 1]} : vector<8x32xf32> to vector<8x8xf32>
    %24 = arith.truncf %23 : vector<8x8xf32> to vector<8x8xbf16>
    %cst_16 = arith.constant dense<0.000000e+00> : vector<8x8xf32>
    %25 = tpu.matmul %20, %22, %cst_16 {dimension_numbers = #tpu.dot_dimension_numbers<[1], [1], [0], [0], [0, 0, 1, 0], [], []>} : vector<8x8xbf16>, vector<8x8xbf16>, vector<8x8xf32> -> vector<8x8xf32>
    %26 = arith.addf %25, %18 : vector<8x8xf32>
    %cst_17 = arith.constant dense<0xFF800000> : vector<8xf32>
    %27 = vector.multi_reduction <maximumf>, %26, %cst_17 [1] : vector<8x8xf32> to vector<8xf32>
    %28 = vector.shape_cast %27 : vector<8xf32> to vector<8x1xf32>
    %29 = vector.broadcast %28 : vector<8x1xf32> to vector<8x8xf32>
    %30 = arith.subf %26, %29 : vector<8x8xf32>
    %31 = math.exp %30 : vector<8x8xf32>
    %cst_18 = arith.constant dense<0.000000e+00> : vector<8xf32>
    %32 = vector.multi_reduction <add>, %31, %cst_18 [1] : vector<8x8xf32> to vector<8xf32>
    %33 = vector.shape_cast %32 : vector<8xf32> to vector<8x1xf32>
    %34 = tpu.reciprocal %33 {approx = true} : vector<8x1xf32> -> vector<8x1xf32>
    %35 = vector.broadcast %34 : vector<8x1xf32> to vector<8x8xf32>
    %36 = arith.mulf %31, %35 : vector<8x8xf32>
    %37 = arith.truncf %36 : vector<8x8xf32> to vector<8x8xbf16>
    %cst_19 = arith.constant dense<0.000000e+00> : vector<8x8xf32>
    %38 = tpu.matmul %37, %24, %cst_19 {dimension_numbers = #tpu.dot_dimension_numbers<[1], [0], [0], [1], [0, 0, 1, 1], [], []>} : vector<8x8xbf16>, vector<8x8xbf16>, vector<8x8xf32> -> vector<8x8xf32>
    %c0_20 = arith.constant 0 : index
    %c0_21 = arith.constant 0 : index
    %39 = vector.load %arg13[%c0_20, %c0_21] : memref<8x32xf32, #tpu.memory_space<vmem>>, vector<8x8xf32>
    tpu.vector_store %arg13[%c0_20, %c0_21], %38 {strides = array<i32>} : memref<8x32xf32, #tpu.memory_space<vmem>>, vector<8x8xf32>,
    %40 = vector.extract_strided_slice %10 {offsets = [0, 8], sizes = [8, 8], strides = [1, 1]} : vector<8x32xf32> to vector<8x8xf32>
    %41 = arith.truncf %40 : vector<8x8xf32> to vector<8x8xbf16>
    %42 = vector.extract_strided_slice %16 {offsets = [0, 8], sizes = [8, 8], strides = [1, 1]} : vector<8x32xf32> to vector<8x8xf32>
    %43 = arith.truncf %42 : vector<8x8xf32> to vector<8x8xbf16>
    %44 = vector.extract_strided_slice %17 {offsets = [0, 8], sizes = [8, 8], strides = [1, 1]} : vector<8x32xf32> to vector<8x8xf32>
    %45 = arith.truncf %44 : vector<8x8xf32> to vector<8x8xbf16>
    %cst_22 = arith.constant dense<0.000000e+00> : vector<8x8xf32>
    %46 = tpu.matmul %41, %43, %cst_22 {dimension_numbers = #tpu.dot_dimension_numbers<[1], [1], [0], [0], [0, 0, 1, 0], [], []>} : vector<8x8xbf16>, vector<8x8xbf16>, vector<8x8xf32> -> vector<8x8xf32>
    %47 = arith.addf %46, %18 : vector<8x8xf32>
    %cst_23 = arith.constant dense<0xFF800000> : vector<8xf32>
    %48 = vector.multi_reduction <maximumf>, %47, %cst_23 [1] : vector<8x8xf32> to vector<8xf32>
    %49 = vector.shape_cast %48 : vector<8xf32> to vector<8x1xf32>
    %50 = vector.broadcast %49 : vector<8x1xf32> to vector<8x8xf32>
    %51 = arith.subf %47, %50 : vector<8x8xf32>
    %52 = math.exp %51 : vector<8x8xf32>
    %cst_24 = arith.constant dense<0.000000e+00> : vector<8xf32>
    %53 = vector.multi_reduction <add>, %52, %cst_24 [1] : vector<8x8xf32> to vector<8xf32>
    %54 = vector.shape_cast %53 : vector<8xf32> to vector<8x1xf32>
    %55 = tpu.reciprocal %54 {approx = true} : vector<8x1xf32> -> vector<8x1xf32>
    %56 = vector.broadcast %55 : vector<8x1xf32> to vector<8x8xf32>
    %57 = arith.mulf %52, %56 : vector<8x8xf32>
    %58 = arith.truncf %57 : vector<8x8xf32> to vector<8x8xbf16>
    %cst_25 = arith.constant dense<0.000000e+00> : vector<8x8xf32>
    %59 = tpu.matmul %58, %45, %cst_25 {dimension_numbers = #tpu.dot_dimension_numbers<[1], [0], [0], [1], [0, 0, 1, 1], [], []>} : vector<8x8xbf16>, vector<8x8xbf16>, vector<8x8xf32> -> vector<8x8xf32>
    %c0_26 = arith.constant 0 : index
    %c8 = arith.constant 8 : index
    %60 = vector.load %arg13[%c0_26, %c8] : memref<8x32xf32, #tpu.memory_space<vmem>>, vector<8x8xf32>
    tpu.vector_store %arg13[%c0_26, %c8], %59 {strides = array<i32>} : memref<8x32xf32, #tpu.memory_space<vmem>>, vector<8x8xf32>,
    %61 = vector.extract_strided_slice %10 {offsets = [0, 16], sizes = [8, 8], strides = [1, 1]} : vector<8x32xf32> to vector<8x8xf32>
    %62 = arith.truncf %61 : vector<8x8xf32> to vector<8x8xbf16>
    %63 = vector.extract_strided_slice %16 {offsets = [0, 16], sizes = [8, 8], strides = [1, 1]} : vector<8x32xf32> to vector<8x8xf32>
    %64 = arith.truncf %63 : vector<8x8xf32> to vector<8x8xbf16>
    %65 = vector.extract_strided_slice %17 {offsets = [0, 16], sizes = [8, 8], strides = [1, 1]} : vector<8x32xf32> to vector<8x8xf32>
    %66 = arith.truncf %65 : vector<8x8xf32> to vector<8x8xbf16>
    %cst_27 = arith.constant dense<0.000000e+00> : vector<8x8xf32>
    %67 = tpu.matmul %62, %64, %cst_27 {dimension_numbers = #tpu.dot_dimension_numbers<[1], [1], [0], [0], [0, 0, 1, 0], [], []>} : vector<8x8xbf16>, vector<8x8xbf16>, vector<8x8xf32> -> vector<8x8xf32>
    %68 = arith.addf %67, %18 : vector<8x8xf32>
    %cst_28 = arith.constant dense<0xFF800000> : vector<8xf32>
    %69 = vector.multi_reduction <maximumf>, %68, %cst_28 [1] : vector<8x8xf32> to vector<8xf32>
    %70 = vector.shape_cast %69 : vector<8xf32> to vector<8x1xf32>
    %71 = vector.broadcast %70 : vector<8x1xf32> to vector<8x8xf32>
    %72 = arith.subf %68, %71 : vector<8x8xf32>
    %73 = math.exp %72 : vector<8x8xf32>
    %cst_29 = arith.constant dense<0.000000e+00> : vector<8xf32>
    %74 = vector.multi_reduction <add>, %73, %cst_29 [1] : vector<8x8xf32> to vector<8xf32>
    %75 = vector.shape_cast %74 : vector<8xf32> to vector<8x1xf32>
    %76 = tpu.reciprocal %75 {approx = true} : vector<8x1xf32> -> vector<8x1xf32>
    %77 = vector.broadcast %76 : vector<8x1xf32> to vector<8x8xf32>
    %78 = arith.mulf %73, %77 : vector<8x8xf32>
    %79 = arith.truncf %78 : vector<8x8xf32> to vector<8x8xbf16>
    %cst_30 = arith.constant dense<0.000000e+00> : vector<8x8xf32>
    %80 = tpu.matmul %79, %66, %cst_30 {dimension_numbers = #tpu.dot_dimension_numbers<[1], [0], [0], [1], [0, 0, 1, 1], [], []>} : vector<8x8xbf16>, vector<8x8xbf16>, vector<8x8xf32> -> vector<8x8xf32>
    %c0_31 = arith.constant 0 : index
    %c16 = arith.constant 16 : index
    %81 = vector.load %arg13[%c0_31, %c16] : memref<8x32xf32, #tpu.memory_space<vmem>>, vector<8x8xf32>
    tpu.vector_store %arg13[%c0_31, %c16], %80 {strides = array<i32>} : memref<8x32xf32, #tpu.memory_space<vmem>>, vector<8x8xf32>,
    %82 = vector.extract_strided_slice %10 {offsets = [0, 24], sizes = [8, 8], strides = [1, 1]} : vector<8x32xf32> to vector<8x8xf32>
    %83 = arith.truncf %82 : vector<8x8xf32> to vector<8x8xbf16>
    %84 = vector.extract_strided_slice %16 {offsets = [0, 24], sizes = [8, 8], strides = [1, 1]} : vector<8x32xf32> to vector<8x8xf32>
    %85 = arith.truncf %84 : vector<8x8xf32> to vector<8x8xbf16>
    %86 = vector.extract_strided_slice %17 {offsets = [0, 24], sizes = [8, 8], strides = [1, 1]} : vector<8x32xf32> to vector<8x8xf32>
    %87 = arith.truncf %86 : vector<8x8xf32> to vector<8x8xbf16>
    %cst_32 = arith.constant dense<0.000000e+00> : vector<8x8xf32>
    %88 = tpu.matmul %83, %85, %cst_32 {dimension_numbers = #tpu.dot_dimension_numbers<[1], [1], [0], [0], [0, 0, 1, 0], [], []>} : vector<8x8xbf16>, vector<8x8xbf16>, vector<8x8xf32> -> vector<8x8xf32>
    %89 = arith.addf %88, %18 : vector<8x8xf32>
    %cst_33 = arith.constant dense<0xFF800000> : vector<8xf32>
    %90 = vector.multi_reduction <maximumf>, %89, %cst_33 [1] : vector<8x8xf32> to vector<8xf32>
    %91 = vector.shape_cast %90 : vector<8xf32> to vector<8x1xf32>
    %92 = vector.broadcast %91 : vector<8x1xf32> to vector<8x8xf32>
    %93 = arith.subf %89, %92 : vector<8x8xf32>
    %94 = math.exp %93 : vector<8x8xf32>
    %cst_34 = arith.constant dense<0.000000e+00> : vector<8xf32>
    %95 = vector.multi_reduction <add>, %94, %cst_34 [1] : vector<8x8xf32> to vector<8xf32>
    %96 = vector.shape_cast %95 : vector<8xf32> to vector<8x1xf32>
    %97 = tpu.reciprocal %96 {approx = true} : vector<8x1xf32> -> vector<8x1xf32>
    %98 = vector.broadcast %97 : vector<8x1xf32> to vector<8x8xf32>
    %99 = arith.mulf %94, %98 : vector<8x8xf32>
    %100 = arith.truncf %99 : vector<8x8xf32> to vector<8x8xbf16>
    %cst_35 = arith.constant dense<0.000000e+00> : vector<8x8xf32>
    %101 = tpu.matmul %100, %87, %cst_35 {dimension_numbers = #tpu.dot_dimension_numbers<[1], [0], [0], [1], [0, 0, 1, 1], [], []>} : vector<8x8xbf16>, vector<8x8xbf16>, vector<8x8xf32> -> vector<8x8xf32>
    %c0_36 = arith.constant 0 : index
    %c24 = arith.constant 24 : index
    %102 = vector.load %arg13[%c0_36, %c24] : memref<8x32xf32, #tpu.memory_space<vmem>>, vector<8x8xf32>
    tpu.vector_store %arg13[%c0_36, %c24], %101 {strides = array<i32>} : memref<8x32xf32, #tpu.memory_space<vmem>>, vector<8x8xf32>,
    %c0_37 = arith.constant 0 : index
    %c0_38 = arith.constant 0 : index
    %103 = vector.load %arg13[%c0_37, %c0_38] : memref<8x32xf32, #tpu.memory_space<vmem>>, vector<8x32xf32>
    %104 = arith.truncf %103 : vector<8x32xf32> to vector<8x32xbf16>
    %c0_39 = arith.constant 0 : index
    %c0_40 = arith.constant 0 : index
    %105 = vector.load %arg8[%c0_39, %c0_40] : memref<32x32xbf16, #tpu.memory_space<vmem>>, vector<32x32xbf16>
    %cst_41 = arith.constant dense<0.000000e+00> : vector<8x32xf32>
    %106 = tpu.matmul %104, %105, %cst_41 {dimension_numbers = #tpu.dot_dimension_numbers<[1], [0], [0], [1], [0, 0, 1, 1], [], []>} : vector<8x32xbf16>, vector<32x32xbf16>, vector<8x32xf32> -> vector<8x32xf32>
    %c0_42 = arith.constant 0 : index
    %c0_43 = arith.constant 0 : index
    %107 = vector.load %arg9[%c0_42, %c0_43] : memref<1x32xf32, #tpu.memory_space<vmem>>, vector<1x32xf32>
    %108 = vector.broadcast %107 : vector<1x32xf32> to vector<8x32xf32>
    %109 = arith.addf %106, %108 : vector<8x32xf32>
    %110 = arith.addf %109, %1 : vector<8x32xf32>
    %cst_44 = arith.constant dense<0.000000e+00> : vector<8xf32>
    %111 = vector.multi_reduction <add>, %110, %cst_44 [1] : vector<8x32xf32> to vector<8xf32>
    %112 = vector.shape_cast %111 : vector<8xf32> to vector<8x1xf32>
    %cst_45 = arith.constant 3.200000e+01 : f32
    %113 = vector.broadcast %cst_45 : f32 to vector<8x1xf32>
    %114 = arith.divf %112, %113 : vector<8x1xf32>
    %115 = vector.broadcast %114 : vector<8x1xf32> to vector<8x32xf32>
    %116 = arith.subf %110, %115 : vector<8x32xf32>
    %117 = arith.mulf %116, %116 : vector<8x32xf32>
    %cst_46 = arith.constant dense<0.000000e+00> : vector<8xf32>
    %118 = vector.multi_reduction <add>, %117, %cst_46 [1] : vector<8x32xf32> to vector<8xf32>
    %119 = vector.shape_cast %118 : vector<8xf32> to vector<8x1xf32>
    %cst_47 = arith.constant 3.200000e+01 : f32
    %120 = vector.broadcast %cst_47 : f32 to vector<8x1xf32>
    %121 = arith.divf %119, %120 : vector<8x1xf32>
    %122 = vector.broadcast %114 : vector<8x1xf32> to vector<8x32xf32>
    %123 = arith.subf %110, %122 : vector<8x32xf32>
    %cst_48 = arith.constant 9.99999997E-7 : f32
    %124 = vector.broadcast %cst_48 : f32 to vector<8x1xf32>
    %125 = arith.addf %121, %124 : vector<8x1xf32>
    %126 = math.rsqrt %125 : vector<8x1xf32>
    %127 = vector.broadcast %126 : vector<8x1xf32> to vector<8x32xf32>
    %128 = arith.mulf %123, %127 : vector<8x32xf32>
    %c0_49 = arith.constant 0 : index
    %c0_50 = arith.constant 0 : index
    %129 = vector.load %arg10[%c0_49, %c0_50] : memref<1x32xf32, #tpu.memory_space<vmem>>, vector<1x32xf32>
    %130 = vector.broadcast %129 : vector<1x32xf32> to vector<8x32xf32>
    %131 = arith.mulf %128, %130 : vector<8x32xf32>
    %c0_51 = arith.constant 0 : index
    %c0_52 = arith.constant 0 : index
    %132 = vector.load %arg11[%c0_51, %c0_52] : memref<1x32xf32, #tpu.memory_space<vmem>>, vector<1x32xf32>
    %133 = vector.broadcast %132 : vector<1x32xf32> to vector<8x32xf32>
    %134 = arith.addf %131, %133 : vector<8x32xf32>
    %c0_53 = arith.constant 0 : index
    %c0_54 = arith.constant 0 : index
    %c0_55 = arith.constant 0 : index
    %135 = vector.load %arg12[%c0_53, %c0_54, %c0_55] : memref<1x8x32xf32, #tpu.memory_space<vmem>>, vector<1x8x32xf32>
    %136 = vector.shape_cast %135 : vector<1x8x32xf32> to vector<8x32xf32>
    %137 = vector.shape_cast %134 : vector<8x32xf32> to vector<1x8x32xf32>
    tpu.vector_store %arg12[%c0_53, %c0_54, %c0_55], %137 {strides = array<i32>} : memref<1x8x32xf32, #tpu.memory_space<vmem>>, vector<1x8x32xf32>,
    return
  }
  func.func @transform_0(%arg0: i32) -> (i32, i32, i32) {
    %c0_i32 = arith.constant 0 : i32
    %c0_i32_0 = arith.constant 0 : i32
    %c0_i32_1 = arith.constant 0 : i32
    return %arg0, %c0_i32, %c0_i32_0 : i32, i32, i32
  }
  func.func @transform_1(%arg0: i32) -> (i32, i32, i32) {
    %c0_i32 = arith.constant 0 : i32
    %c0_i32_0 = arith.constant 0 : i32
    %c0_i32_1 = arith.constant 0 : i32
    return %arg0, %c0_i32, %c0_i32_0 : i32, i32, i32
  }
  func.func @transform_2(%arg0: i32) -> (i32, i32) {
    %c0_i32 = arith.constant 0 : i32
    %c0_i32_0 = arith.constant 0 : i32
    %c0_i32_1 = arith.constant 0 : i32
    return %c0_i32, %c0_i32_0 : i32, i32
  }
  func.func @transform_3(%arg0: i32) -> (i32, i32) {
    %c0_i32 = arith.constant 0 : i32
    %c0_i32_0 = arith.constant 0 : i32
    %c0_i32_1 = arith.constant 0 : i32
    return %c0_i32, %c0_i32_0 : i32, i32
  }
  func.func @transform_4(%arg0: i32) -> (i32, i32) {
    %c0_i32 = arith.constant 0 : i32
    %c0_i32_0 = arith.constant 0 : i32
    %c0_i32_1 = arith.constant 0 : i32
    return %c0_i32, %c0_i32_0 : i32, i32
  }
  func.func @transform_5(%arg0: i32) -> (i32, i32) {
    %c0_i32 = arith.constant 0 : i32
    %c0_i32_0 = arith.constant 0 : i32
    %c0_i32_1 = arith.constant 0 : i32
    return %c0_i32, %c0_i32_0 : i32, i32
  }
  func.func @transform_6(%arg0: i32) -> (i32, i32) {
    %c0_i32 = arith.constant 0 : i32
    %c0_i32_0 = arith.constant 0 : i32
    %c0_i32_1 = arith.constant 0 : i32
    return %c0_i32, %c0_i32_0 : i32, i32
  }
  func.func @transform_7(%arg0: i32) -> (i32, i32) {
    %c0_i32 = arith.constant 0 : i32
    %c0_i32_0 = arith.constant 0 : i32
    %c0_i32_1 = arith.constant 0 : i32
    return %c0_i32, %c0_i32_0 : i32, i32
  }
  func.func @transform_8(%arg0: i32) -> (i32, i32) {
    %c0_i32 = arith.constant 0 : i32
    %c0_i32_0 = arith.constant 0 : i32
    %c0_i32_1 = arith.constant 0 : i32
    return %c0_i32, %c0_i32_0 : i32, i32
  }
  func.func @transform_9(%arg0: i32) -> (i32, i32) {
    %c0_i32 = arith.constant 0 : i32
    %c0_i32_0 = arith.constant 0 : i32
    %c0_i32_1 = arith.constant 0 : i32
    return %c0_i32, %c0_i32_0 : i32, i32
  }
  func.func @transform_10(%arg0: i32) -> (i32, i32) {
    %c0_i32 = arith.constant 0 : i32
    %c0_i32_0 = arith.constant 0 : i32
    %c0_i32_1 = arith.constant 0 : i32
    return %c0_i32, %c0_i32_0 : i32, i32
  }
  func.func @transform_11(%arg0: i32) -> (i32, i32, i32) {
    %c0_i32 = arith.constant 0 : i32
    %c0_i32_0 = arith.constant 0 : i32
    %c0_i32_1 = arith.constant 0 : i32
    return %arg0, %c0_i32, %c0_i32_0 : i32, i32, i32
  }
}

</mosaic_0001>

<llo_original>
// kernel: tpu_custom_call.1
$region0: #{tpu_custom_call.1}
  #allocation0 [shape = 'u32[]', space=smem, size = 0x4, offset = 0x4, fixed_abs, tag = 'smem constant byte address 0x4 - core index']
  #allocation1 [shape = 'u32[72,128]{1,0:T(1,128)}', space=vmem, size = 0x9000, scoped, tag = 'internal scratch']
  #allocation2 [shape = 'f32[8,32]{1,0:T(8,128)}', space=vmem, size = 0x1000, scoped, tag = 'scratch operand']
  %s0 = inlined_call_operand.hbm [shape: f32[2,8,32], index: 0, kind: input, shape index: {}]
  %s1 = inlined_call_operand.hbm [shape: f32[2,8,32], index: 1, kind: input, shape index: {}]
  %s2 = inlined_call_operand.hbm [shape: f32[8,8], index: 2, kind: input, shape index: {}]
  %s3 = inlined_call_operand.hbm [shape: bf16[32,32], index: 3, kind: input, shape index: {}]
  %s4 = inlined_call_operand.vmem [shape: f32[1,32], index: 4, kind: input, shape index: {}]
  %s5 = inlined_call_operand.hbm [shape: bf16[32,64], index: 5, kind: input, shape index: {}]
  %s6 = inlined_call_operand.vmem [shape: f32[1,64], index: 6, kind: input, shape index: {}]
  %s7 = inlined_call_operand.hbm [shape: bf16[32,32], index: 7, kind: input, shape index: {}]
  %s8 = inlined_call_operand.vmem [shape: f32[1,32], index: 8, kind: input, shape index: {}]
  %s9 = inlined_call_operand.vmem [shape: f32[1,32], index: 9, kind: input, shape index: {}]
  %s10 = inlined_call_operand.vmem [shape: f32[1,32], index: 10, kind: input, shape index: {}]
  %s11 = inlined_call_operand.hbm [shape: f32[2,8,32], index: 11, kind: output, shape index: {}]
  %s12 = sld [smem:[#allocation0]]
  $region101: #{tpu_custom_call.1} parent=0
    _
  %s14 = ssub.s32 1, %s12
  %s15 = scalar_select 0, %s14, %s12
  $region1: #{tpu_custom_call.1} parent=0
    #allocation3 [shape = 'u8[8192]{0}', space=vmem, size = 0x2000, scoped, tag = 'input window, operand 0']
    #allocation4 [shape = 's32[2]{0}', space=sflag, size = 0x8, scoped, tag = 'scoped memory for tpu_custom_call.1']
    #allocation5 [shape = 's32[2]{0}', space=sflag, size = 0x8, scoped, tag = 'scoped memory for tpu_custom_call.1']
    #allocation6 [shape = 'u8[8192]{0}', space=vmem, size = 0x2000, scoped, tag = 'input window, operand 1']
    #allocation7 [shape = 's32[2]{0}', space=sflag, size = 0x8, scoped, tag = 'scoped memory for tpu_custom_call.1']
    #allocation8 [shape = 'u8[4096]{0}', space=vmem, size = 0x1000, scoped, tag = 'input window, operand 2, single buffered']
    #allocation9 [shape = 'u8[8192]{0}', space=vmem, size = 0x2000, scoped, tag = 'input window, operand 3, single buffered']
    #allocation10 [shape = 's32[1]{0}', space=sflag, size = 0x4, scoped, tag = 'scoped memory for tpu_custom_call.1']
    #allocation11 [shape = 'u8[8192]{0}', space=vmem, size = 0x2000, scoped, tag = 'input window, operand 5, single buffered']
    #allocation12 [shape = 'u8[8192]{0}', space=vmem, size = 0x2000, scoped, tag = 'input window, operand 7, single buffered']
    #allocation13 [shape = 's32[1]{0}', space=sflag, size = 0x4, scoped, tag = 'scoped memory for tpu_custom_call.1']
    #allocation14 [shape = 'u8[8192]{0}', space=vmem, size = 0x2000, scoped, tag = 'output window, operand 0']
    %16 = vsyncpa [#allocation4], 0
    %s17 = scalar_lea.sflag [#allocation4], 1
    %18 = vsyncpa %s17, 0
    %19 = vsyncpa [#allocation7], 0
    %s20 = scalar_lea.sflag [#allocation7], 1
    %21 = vsyncpa %s20, 0
    %22 = vsyncpa [#allocation10], 0
    %23 = vsyncpa [#allocation13], 0
    %24 = vsyncpa [#allocation5], 0
    %s25 = scalar_lea.sflag [#allocation5], 1
    %26 = vsyncpa %s25, 0
    loop: start=0, step=1, limit=4
    $region2: #{tpu_custom_call.1} parent=1 // loop_pre_header
      _
    $region3: #{tpu_custom_call.1} parent=1 // loop_header
      %s28 = sphi 0, %s32
      %p29 = scmp.ge.s32.totalorder %s28, 4
      %s38 = sphi 0, %s40
      %s41 = sphi 0, %s38
      %s42 = sphi 0, %s41
      %s58 = sphi 0, %s42
      %s64 = sphi 0, %s66
      %s67 = sphi 0, %s64
      %s68 = sphi 0, %s67
      %s84 = sphi 0, %s68
      %s88 = sphi 0, %s88
      %s90 = sphi 0, %s88
      %s91 = sphi 0, %s90
      %s105 = sphi 0, %s91
      %s109 = sphi 0, %s109
      %s111 = sphi 0, %s109
      %s112 = sphi 0, %s111
      %s126 = sphi 0, %s112
      %s130 = sphi 0, %s130
      %s132 = sphi 0, %s130
      %s133 = sphi 0, %s132
      %s147 = sphi 0, %s133
      %s151 = sphi 0, %s151
      %s153 = sphi 0, %s151
      %s154 = sphi 0, %s153
      %s168 = sphi 0, %s154
      %s172 = sphi 0, %s172
      %s174 = sphi 0, %s172
      %s175 = sphi 0, %s174
      %s189 = sphi 0, %s175
      %s193 = sphi 0, %s193
      %s195 = sphi 0, %s193
      %s196 = sphi 0, %s195
      %s210 = sphi 0, %s196
      %s214 = sphi 0, %s214
      %s216 = sphi 0, %s214
      %s217 = sphi 0, %s216
      %s231 = sphi 0, %s217
      %s235 = sphi 0, %s235
      %s237 = sphi 0, %s235
      %s238 = sphi 0, %s237
      %s252 = sphi 0, %s238
      %s256 = sphi 0, %s256
      %s258 = sphi 0, %s256
      %s259 = sphi 0, %s258
      %s273 = sphi 0, %s259
      %s279 = sphi 0, %s281
      %s282 = sphi 0, %s279
      %s283 = sphi 0, %s282
      %s299 = sphi 0, %s283
    $region4: #{tpu_custom_call.1} parent=1 // loop_header_branch
      %31 = sbr.rel (%p29) target = $region8
    $region5: #{tpu_custom_call.1} parent=1 // loop_body
      %s33 = ssub.s32 %s28, 1
      %s34 = ssub.s32 %s28, 2
      %s35 = sadd.s32 %s28, 1
      %s36 = ssub.s32 %s28, %s35
      %p37 = scmp.eq.s32.totalorder %s36, 0
      %s39 = sadd.s32 %s38, 1
      %s40 = scalar_select %p37, %s38, %s39
      %p43 = pneg %p37
      %p44 = scmp.eq.s32.totalorder %s28, 1
      %p45 = por %p43, %p44
      %p46 = scmp.ne.s32.totalorder %s38, %s41
      %p47 = scmp.eq.s32.totalorder %s28, 0
      %p48 = por %p46, %p47
      %p49 = scmp.ne.s32.totalorder %s38, %s41
      %p50 = scmp.eq.s32.totalorder %s33, 1
      %p51 = por %p49, %p50
      %p52 = scmp.ne.s32.totalorder %s41, %s42
      %p53 = scmp.eq.s32.totalorder %s33, 0
      %p54 = por %p52, %p53
      %p55 = scmp.ne.s32.totalorder %s41, %s42
      %p56 = scmp.eq.s32.totalorder %s34, 1
      %p57 = por %p55, %p56
      %p59 = scmp.ne.s32.totalorder %s42, %s58
      %p60 = scmp.eq.s32.totalorder %s34, 0
      %p61 = por %p59, %p60
      %s62 = ssub.s32 %s28, %s35
      %p63 = scmp.eq.s32.totalorder %s62, 0
      %s65 = sadd.s32 %s64, 1
      %s66 = scalar_select %p63, %s64, %s65
      %p69 = pneg %p63
      %p70 = scmp.eq.s32.totalorder %s28, 1
      %p71 = por %p69, %p70
      %p72 = scmp.ne.s32.totalorder %s64, %s67
      %p73 = scmp.eq.s32.totalorder %s28, 0
      %p74 = por %p72, %p73
      %p75 = scmp.ne.s32.totalorder %s64, %s67
      %p76 = scmp.eq.s32.totalorder %s33, 1
      %p77 = por %p75, %p76
      %p78 = scmp.ne.s32.totalorder %s67, %s68
      %p79 = scmp.eq.s32.totalorder %s33, 0
      %p80 = por %p78, %p79
      %p81 = scmp.ne.s32.totalorder %s67, %s68
      %p82 = scmp.eq.s32.totalorder %s34, 1
      %p83 = por %p81, %p82
      %p85 = scmp.ne.s32.totalorder %s68, %s84
      %p86 = scmp.eq.s32.totalorder %s34, 0
      %p87 = por %p85, %p86
      %s89 = sadd.s32 %s88, 1
      %p92 = scmp.eq.s32.totalorder %s28, 1
      %p93 = scmp.ne.s32.totalorder %s88, %s90
      %p94 = scmp.eq.s32.totalorder %s28, 0
      %p95 = por %p93, %p94
      %p96 = scmp.ne.s32.totalorder %s88, %s90
      %p97 = scmp.eq.s32.totalorder %s33, 1
      %p98 = por %p96, %p97
      %p99 = scmp.ne.s32.totalorder %s90, %s91
      %p100 = scmp.eq.s32.totalorder %s33, 0
      %p101 = por %p99, %p100
      %p102 = scmp.ne.s32.totalorder %s90, %s91
      %p103 = scmp.eq.s32.totalorder %s34, 1
      %p104 = por %p102, %p103
      %p106 = scmp.ne.s32.totalorder %s91, %s105
      %p107 = scmp.eq.s32.totalorder %s34, 0
      %p108 = por %p106, %p107
      %s110 = sadd.s32 %s109, 1
      %p113 = scmp.eq.s32.totalorder %s28, 1
      %p114 = scmp.ne.s32.totalorder %s109, %s111
      %p115 = scmp.eq.s32.totalorder %s28, 0
      %p116 = por %p114, %p115
      %p117 = scmp.ne.s32.totalorder %s109, %s111
      %p118 = scmp.eq.s32.totalorder %s33, 1
      %p119 = por %p117, %p118
      %p120 = scmp.ne.s32.totalorder %s111, %s112
      %p121 = scmp.eq.s32.totalorder %s33, 0
      %p122 = por %p120, %p121
      %p123 = scmp.ne.s32.totalorder %s111, %s112
      %p124 = scmp.eq.s32.totalorder %s34, 1
      %p125 = por %p123, %p124
      %p127 = scmp.ne.s32.totalorder %s112, %s126
      %p128 = scmp.eq.s32.totalorder %s34, 0
      %p129 = por %p127, %p128
      %s131 = sadd.s32 %s130, 1
      %p134 = scmp.eq.s32.totalorder %s28, 1
      %p135 = scmp.ne.s32.totalorder %s130, %s132
      %p136 = scmp.eq.s32.totalorder %s28, 0
      %p137 = por %p135, %p136
      %p138 = scmp.ne.s32.totalorder %s130, %s132
      %p139 = scmp.eq.s32.totalorder %s33, 1
      %p140 = por %p138, %p139
      %p141 = scmp.ne.s32.totalorder %s132, %s133
      %p142 = scmp.eq.s32.totalorder %s33, 0
      %p143 = por %p141, %p142
      %p144 = scmp.ne.s32.totalorder %s132, %s133
      %p145 = scmp.eq.s32.totalorder %s34, 1
      %p146 = por %p144, %p145
      %p148 = scmp.ne.s32.totalorder %s133, %s147
      %p149 = scmp.eq.s32.totalorder %s34, 0
      %p150 = por %p148, %p149
      %s152 = sadd.s32 %s151, 1
      %p155 = scmp.eq.s32.totalorder %s28, 1
      %p156 = scmp.ne.s32.totalorder %s151, %s153
      %p157 = scmp.eq.s32.totalorder %s28, 0
      %p158 = por %p156, %p157
      %p159 = scmp.ne.s32.totalorder %s151, %s153
      %p160 = scmp.eq.s32.totalorder %s33, 1
      %p161 = por %p159, %p160
      %p162 = scmp.ne.s32.totalorder %s153, %s154
      %p163 = scmp.eq.s32.totalorder %s33, 0
      %p164 = por %p162, %p163
      %p165 = scmp.ne.s32.totalorder %s153, %s154
      %p166 = scmp.eq.s32.totalorder %s34, 1
      %p167 = por %p165, %p166
      %p169 = scmp.ne.s32.totalorder %s154, %s168
      %p170 = scmp.eq.s32.totalorder %s34, 0
      %p171 = por %p169, %p170
      %s173 = sadd.s32 %s172, 1
      %p176 = scmp.eq.s32.totalorder %s28, 1
      %p177 = scmp.ne.s32.totalorder %s172, %s174
      %p178 = scmp.eq.s32.totalorder %s28, 0
      %p179 = por %p177, %p178
      %p180 = scmp.ne.s32.totalorder %s172, %s174
      %p181 = scmp.eq.s32.totalorder %s33, 1
      %p182 = por %p180, %p181
      %p183 = scmp.ne.s32.totalorder %s174, %s175
      %p184 = scmp.eq.s32.totalorder %s33, 0
      %p185 = por %p183, %p184
      %p186 = scmp.ne.s32.totalorder %s174, %s175
      %p187 = scmp.eq.s32.totalorder %s34, 1
      %p188 = por %p186, %p187
      %p190 = scmp.ne.s32.totalorder %s175, %s189
      %p191 = scmp.eq.s32.totalorder %s34, 0
      %p192 = por %p190, %p191
      %s194 = sadd.s32 %s193, 1
      %p197 = scmp.eq.s32.totalorder %s28, 1
      %p198 = scmp.ne.s32.totalorder %s193, %s195
      %p199 = scmp.eq.s32.totalorder %s28, 0
      %p200 = por %p198, %p199
      %p201 = scmp.ne.s32.totalorder %s193, %s195
      %p202 = scmp.eq.s32.totalorder %s33, 1
      %p203 = por %p201, %p202
      %p204 = scmp.ne.s32.totalorder %s195, %s196
      %p205 = scmp.eq.s32.totalorder %s33, 0
      %p206 = por %p204, %p205
      %p207 = scmp.ne.s32.totalorder %s195, %s196
      %p208 = scmp.eq.s32.totalorder %s34, 1
      %p209 = por %p207, %p208
      %p211 = scmp.ne.s32.totalorder %s196, %s210
      %p212 = scmp.eq.s32.totalorder %s34, 0
      %p213 = por %p211, %p212
      %s215 = sadd.s32 %s214, 1
      %p218 = scmp.eq.s32.totalorder %s28, 1
      %p219 = scmp.ne.s32.totalorder %s214, %s216
      %p220 = scmp.eq.s32.totalorder %s28, 0
      %p221 = por %p219, %p220
      %p222 = scmp.ne.s32.totalorder %s214, %s216
      %p223 = scmp.eq.s32.totalorder %s33, 1
      %p224 = por %p222, %p223
      %p225 = scmp.ne.s32.totalorder %s216, %s217
      %p226 = scmp.eq.s32.totalorder %s33, 0
      %p227 = por %p225, %p226
      %p228 = scmp.ne.s32.totalorder %s216, %s217
      %p229 = scmp.eq.s32.totalorder %s34, 1
      %p230 = por %p228, %p229
      %p232 = scmp.ne.s32.totalorder %s217, %s231
      %p233 = scmp.eq.s32.totalorder %s34, 0
      %p234 = por %p232, %p233
      %s236 = sadd.s32 %s235, 1
      %p239 = scmp.eq.s32.totalorder %s28, 1
      %p240 = scmp.ne.s32.totalorder %s235, %s237
      %p241 = scmp.eq.s32.totalorder %s28, 0
      %p242 = por %p240, %p241
      %p243 = scmp.ne.s32.totalorder %s235, %s237
      %p244 = scmp.eq.s32.totalorder %s33, 1
      %p245 = por %p243, %p244
      %p246 = scmp.ne.s32.totalorder %s237, %s238
      %p247 = scmp.eq.s32.totalorder %s33, 0
      %p248 = por %p246, %p247
      %p249 = scmp.ne.s32.totalorder %s237, %s238
      %p250 = scmp.eq.s32.totalorder %s34, 1
      %p251 = por %p249, %p250
      %p253 = scmp.ne.s32.totalorder %s238, %s252
      %p254 = scmp.eq.s32.totalorder %s34, 0
      %p255 = por %p253, %p254
      %s257 = sadd.s32 %s256, 1
      %p260 = scmp.eq.s32.totalorder %s28, 1
      %p261 = scmp.ne.s32.totalorder %s256, %s258
      %p262 = scmp.eq.s32.totalorder %s28, 0
      %p263 = por %p261, %p262
      %p264 = scmp.ne.s32.totalorder %s256, %s258
      %p265 = scmp.eq.s32.totalorder %s33, 1
      %p266 = por %p264, %p265
      %p267 = scmp.ne.s32.totalorder %s258, %s259
      %p268 = scmp.eq.s32.totalorder %s33, 0
      %p269 = por %p267, %p268
      %p270 = scmp.ne.s32.totalorder %s258, %s259
      %p271 = scmp.eq.s32.totalorder %s34, 1
      %p272 = por %p270, %p271
      %p274 = scmp.ne.s32.totalorder %s259, %s273
      %p275 = scmp.eq.s32.totalorder %s34, 0
      %p276 = por %p274, %p275
      %s277 = ssub.s32 %s28, %s35
      %p278 = scmp.eq.s32.totalorder %s277, 0
      %s280 = sadd.s32 %s279, 1
      %s281 = scalar_select %p278, %s279, %s280
      %p284 = pneg %p278
      %p285 = scmp.eq.s32.totalorder %s28, 1
      %p286 = por %p284, %p285
      %p287 = scmp.ne.s32.totalorder %s279, %s282
      %p288 = scmp.eq.s32.totalorder %s28, 0
      %p289 = por %p287, %p288
      %p290 = scmp.ne.s32.totalorder %s279, %s282
      %p291 = scmp.eq.s32.totalorder %s33, 1
      %p292 = por %p290, %p291
      %p293 = scmp.ne.s32.totalorder %s282, %s283
      %p294 = scmp.eq.s32.totalorder %s33, 0
      %p295 = por %p293, %p294
      %p296 = scmp.ne.s32.totalorder %s282, %s283
      %p297 = scmp.eq.s32.totalorder %s34, 1
      %p298 = por %p296, %p297
      %p300 = scmp.ne.s32.totalorder %s283, %s299
      %p301 = scmp.eq.s32.totalorder %s34, 0
      %p302 = por %p300, %p301
      %p303 = scmp.le.s32.totalorder 1, %s28
      %p304 = scmp.lt.s32.totalorder %s28, 3
      %p305 = pnand %p303, %p304
      %p306 = pneg %p305
      // Predicated region
      $region9: #{tpu_custom_call.1} parent=5 // pred_check
        _
      $region10: #{tpu_custom_call.1} parent=5 // pred_check_branch
        %308 = sbr.rel (%p305) target = $region12
      $region11: #{tpu_custom_call.1} parent=5 // pred_region
        %s309 = ssub.s32 %s28, 1
        // Predicated region
        $region13: #{tpu_custom_call.1} parent=11 // pred_check
          %p310 = pneg %p101
        $region14: #{tpu_custom_call.1} parent=11 // pred_check_branch
          %312 = sbr.rel (%p310) target = $region16
        $region15: #{tpu_custom_call.1} parent=11 // pred_region
          %314 = vsyncadd [#allocation7], 0
          %s316 = sshll.u32 %s2, 4
          %s317 = int_to_ptr.hbm [resolvable:$true] %s316
          %s318 = sshll.u32 [#allocation8], 4
          %s319 = int_to_ptr.vmem [resolvable:$true] %s318
          %321 = dma.hbm_to_vmem [thread:$0]  %s317, 128, %s319, [#allocation7]
        $region16: #{tpu_custom_call.1} parent=11 // pred_fallthru
          _
        // Predicated region
        $region17: #{tpu_custom_call.1} parent=11 // pred_check
          %p322 = pneg %p122
        $region18: #{tpu_custom_call.1} parent=11 // pred_check_branch
          %324 = sbr.rel (%p322) target = $region20
        $region19: #{tpu_custom_call.1} parent=11 // pred_region
          %326 = vsyncadd [#allocation10], 0
          %s327 = sshll.u32 %s3, 4
          %s328 = int_to_ptr.hbm [resolvable:$true] %s327
          %s329 = sshll.u32 [#allocation9], 4
          %s330 = int_to_ptr.vmem [resolvable:$true] %s329
          %335 = dma.hbm_to_vmem [thread:$0]  %s328, 256, %s330, [#allocation10], 64, 64, 4
        $region20: #{tpu_custom_call.1} parent=11 // pred_fallthru
          _
        // Predicated region
        $region21: #{tpu_custom_call.1} parent=11 // pred_check
          %p336 = pneg %p143
        $region22: #{tpu_custom_call.1} parent=11 // pred_check_branch
          %338 = sbr.rel (%p336) target = $region24
        $region23: #{tpu_custom_call.1} parent=11 // pred_region
          _
        $region24: #{tpu_custom_call.1} parent=11 // pred_fallthru
          _
        // Predicated region
        $region25: #{tpu_custom_call.1} parent=11 // pred_check
          %p339 = pneg %p164
        $region26: #{tpu_custom_call.1} parent=11 // pred_check_branch
          %341 = sbr.rel (%p339) target = $region28
        $region27: #{tpu_custom_call.1} parent=11 // pred_region
          %343 = vsyncadd [#allocation10], 0
          %s344 = sshll.u32 %s5, 4
          %s345 = int_to_ptr.hbm [resolvable:$true] %s344
          %s346 = sshll.u32 [#allocation11], 4
          %s347 = int_to_ptr.vmem [resolvable:$true] %s346
          %352 = dma.hbm_to_vmem [thread:$0]  %s345, 256, %s347, [#allocation10], 64, 64, 4
        $region28: #{tpu_custom_call.1} parent=11 // pred_fallthru
          _
        // Predicated region
        $region29: #{tpu_custom_call.1} parent=11 // pred_check
          %p353 = pneg %p185
        $region30: #{tpu_custom_call.1} parent=11 // pred_check_branch
          %355 = sbr.rel (%p353) target = $region32
        $region31: #{tpu_custom_call.1} parent=11 // pred_region
          _
        $region32: #{tpu_custom_call.1} parent=11 // pred_fallthru
          _
        // Predicated region
        $region33: #{tpu_custom_call.1} parent=11 // pred_check
          %p356 = pneg %p206
        $region34: #{tpu_custom_call.1} parent=11 // pred_check_branch
          %358 = sbr.rel (%p356) target = $region36
        $region35: #{tpu_custom_call.1} parent=11 // pred_region
          %360 = vsyncadd [#allocation13], 0
          %s361 = sshll.u32 %s7, 4
          %s362 = int_to_ptr.hbm [resolvable:$true] %s361
          %s363 = sshll.u32 [#allocation12], 4
          %s364 = int_to_ptr.vmem [resolvable:$true] %s363
          %369 = dma.hbm_to_vmem [thread:$0]  %s362, 256, %s364, [#allocation13], 64, 64, 4
        $region36: #{tpu_custom_call.1} parent=11 // pred_fallthru
          _
        // Predicated region
        $region37: #{tpu_custom_call.1} parent=11 // pred_check
          %p370 = pneg %p227
        $region38: #{tpu_custom_call.1} parent=11 // pred_check_branch
          %372 = sbr.rel (%p370) target = $region40
        $region39: #{tpu_custom_call.1} parent=11 // pred_region
          _
        $region40: #{tpu_custom_call.1} parent=11 // pred_fallthru
          _
        // Predicated region
        $region41: #{tpu_custom_call.1} parent=11 // pred_check
          %p373 = pneg %p248
        $region42: #{tpu_custom_call.1} parent=11 // pred_check_branch
          %375 = sbr.rel (%p373) target = $region44
        $region43: #{tpu_custom_call.1} parent=11 // pred_region
          _
        $region44: #{tpu_custom_call.1} parent=11 // pred_fallthru
          _
        // Predicated region
        $region45: #{tpu_custom_call.1} parent=11 // pred_check
          %p376 = pneg %p269
        $region46: #{tpu_custom_call.1} parent=11 // pred_check_branch
          %378 = sbr.rel (%p376) target = $region48
        $region47: #{tpu_custom_call.1} parent=11 // pred_region
          _
        $region48: #{tpu_custom_call.1} parent=11 // pred_fallthru
          _
      $region12: #{tpu_custom_call.1} parent=5 // pred_fallthru
        _
      %p379 = scmp.lt.s32.totalorder %s28, 2
      // Predicated region
      $region49: #{tpu_custom_call.1} parent=5 // pred_check
        %p380 = pneg %p379
      $region50: #{tpu_custom_call.1} parent=5 // pred_check_branch
        %382 = sbr.rel (%p380) target = $region52
      $region51: #{tpu_custom_call.1} parent=5 // pred_region
        // Predicated region
        $region53: #{tpu_custom_call.1} parent=51 // pred_check
          %p383 = pneg %p48
        $region54: #{tpu_custom_call.1} parent=51 // pred_check_branch
          %385 = sbr.rel (%p383) target = $region56
        $region55: #{tpu_custom_call.1} parent=51 // pred_region
          %s386 = sand.u32 %s38, 1
          %s387 = scalar_lea.sflag [#allocation4], %s386
          %s388 = sand.u32 %s38, 1
          %s389 = smul.addr %s388, 8
          %s390 = scalar_lea.vmem [#allocation3], %s389
          %392 = vsyncadd %s387, 0
          %s393 = smul.addr %s28, 8
          %s394 = scalar_lea.hbm %s0, %s393
          %s396 = sshll.u32 %s394, 4
          %s397 = int_to_ptr.hbm [resolvable:$true] %s396
          %s398 = sshll.u32 %s390, 4
          %s399 = int_to_ptr.vmem [resolvable:$true] %s398
          %401 = dma.hbm_to_vmem [thread:$0]  %s397, 128, %s399, %s387
        $region56: #{tpu_custom_call.1} parent=51 // pred_fallthru
          _
        // Predicated region
        $region57: #{tpu_custom_call.1} parent=51 // pred_check
          %p402 = pneg %p74
        $region58: #{tpu_custom_call.1} parent=51 // pred_check_branch
          %404 = sbr.rel (%p402) target = $region60
        $region59: #{tpu_custom_call.1} parent=51 // pred_region
          %s405 = sand.u32 %s28, 1
          %s406 = scalar_lea.sflag [#allocation7], %s405
          %s407 = sand.u32 %s64, 1
          %s408 = smul.addr %s407, 8
          %s409 = scalar_lea.vmem [#allocation6], %s408
          %411 = vsyncadd %s406, 0
          %s412 = smul.addr %s28, 8
          %s413 = scalar_lea.hbm %s1, %s412
          %s415 = sshll.u32 %s413, 4
          %s416 = int_to_ptr.hbm [resolvable:$true] %s415
          %s417 = sshll.u32 %s409, 4
          %s418 = int_to_ptr.vmem [resolvable:$true] %s417
          %420 = dma.hbm_to_vmem [thread:$0]  %s416, 128, %s418, %s406
        $region60: #{tpu_custom_call.1} parent=51 // pred_fallthru
          _
      $region52: #{tpu_custom_call.1} parent=5 // pred_fallthru
        _
      %p421 = scmp.le.s32.totalorder 1, %s28
      %p422 = scmp.lt.s32.totalorder %s28, 3
      %p423 = pnand %p421, %p422
      %p424 = pneg %p423
      // Predicated region
      $region61: #{tpu_custom_call.1} parent=5 // pred_check
        _
      $region62: #{tpu_custom_call.1} parent=5 // pred_check_branch
        %426 = sbr.rel (%p423) target = $region64
      $region63: #{tpu_custom_call.1} parent=5 // pred_region
        %s427 = ssub.s32 %s28, 1
        %s428 = sand.u32 %s41, 1
        %s429 = scalar_lea.sflag [#allocation4], %s428
        %s430 = sand.u32 %s41, 1
        %s431 = smul.addr %s430, 8
        %s432 = scalar_lea.vmem [#allocation3], %s431
        // Predicated region
        $region65: #{tpu_custom_call.1} parent=63 // pred_check
          %p433 = pneg %p54
        $region66: #{tpu_custom_call.1} parent=63 // pred_check_branch
          %435 = sbr.rel (%p433) target = $region68
        $region67: #{tpu_custom_call.1} parent=63 // pred_region
          %437 = dma.done %s429, 128
        $region68: #{tpu_custom_call.1} parent=63 // pred_fallthru
          _
        %s438 = sand.u32 %s33, 1
        %s439 = scalar_lea.sflag [#allocation7], %s438
        %s440 = sand.u32 %s67, 1
        %s441 = smul.addr %s440, 8
        %s442 = scalar_lea.vmem [#allocation6], %s441
        // Predicated region
        $region69: #{tpu_custom_call.1} parent=63 // pred_check
          %p443 = pneg %p80
        $region70: #{tpu_custom_call.1} parent=63 // pred_check_branch
          %445 = sbr.rel (%p443) target = $region72
        $region71: #{tpu_custom_call.1} parent=63 // pred_region
          %447 = dma.done %s439, 128
        $region72: #{tpu_custom_call.1} parent=63 // pred_fallthru
          _
        // Predicated region
        $region73: #{tpu_custom_call.1} parent=63 // pred_check
          %p448 = pneg %p101
        $region74: #{tpu_custom_call.1} parent=63 // pred_check_branch
          %450 = sbr.rel (%p448) target = $region76
        $region75: #{tpu_custom_call.1} parent=63 // pred_region
          %452 = dma.done [#allocation7], 128
        $region76: #{tpu_custom_call.1} parent=63 // pred_fallthru
          _
        // Predicated region
        $region77: #{tpu_custom_call.1} parent=63 // pred_check
          %p453 = pneg %p122
        $region78: #{tpu_custom_call.1} parent=63 // pred_check_branch
          %455 = sbr.rel (%p453) target = $region80
        $region79: #{tpu_custom_call.1} parent=63 // pred_region
          %457 = dma.done [#allocation10], 256
        $region80: #{tpu_custom_call.1} parent=63 // pred_fallthru
          _
        // Predicated region
        $region81: #{tpu_custom_call.1} parent=63 // pred_check
          %p458 = pneg %p164
        $region82: #{tpu_custom_call.1} parent=63 // pred_check_branch
          %460 = sbr.rel (%p458) target = $region84
        $region83: #{tpu_custom_call.1} parent=63 // pred_region
          %462 = dma.done [#allocation10], 256
        $region84: #{tpu_custom_call.1} parent=63 // pred_fallthru
          _
        // Predicated region
        $region85: #{tpu_custom_call.1} parent=63 // pred_check
          %p463 = pneg %p206
        $region86: #{tpu_custom_call.1} parent=63 // pred_check_branch
          %465 = sbr.rel (%p463) target = $region88
        $region87: #{tpu_custom_call.1} parent=63 // pred_region
          %467 = dma.done [#allocation13], 256
        $region88: #{tpu_custom_call.1} parent=63 // pred_fallthru
          _
        %s468 = sand.u32 %s41, 1
        %s469 = scalar_lea.sflag [#allocation4], %s468
        %s470 = sand.u32 %s41, 1
        %s471 = smul.addr %s470, 8
        %s472 = scalar_lea.vmem [#allocation3], %s471
        %p473 = pneg %p54
        %p474 = pneg %p51
        %s475 = sand.u32 %s33, 1
        %s476 = scalar_lea.sflag [#allocation7], %s475
        %s477 = sand.u32 %s67, 1
        %s478 = smul.addr %s477, 8
        %s479 = scalar_lea.vmem [#allocation6], %s478
        %p480 = pneg %p80
        %p481 = pneg %p77
        %p482 = pneg %p101
        %p483 = pneg %p98
        %p484 = pneg %p122
        %p485 = pneg %p119
        %p486 = pneg %p143
        %p487 = pneg %p140
        %p488 = pneg %p164
        %p489 = pneg %p161
        %p490 = pneg %p185
        %p491 = pneg %p182
        %p492 = pneg %p206
        %p493 = pneg %p203
        %p494 = pneg %p227
        %p495 = pneg %p224
        %p496 = pneg %p248
        %p497 = pneg %p245
        %p498 = pneg %p269
        %p499 = pneg %p266
        %p500 = pneg %p295
        %p501 = pneg %p292
        %s502 = sand.u32 %s282, 1
        %s503 = scalar_lea.sflag [#allocation5], %s502
        %s504 = sand.u32 %s282, 1
        %s505 = smul.addr %s504, 8
        %s506 = scalar_lea.vmem [#allocation14], %s505
        %v508 = vld [vmem:[%s432] sm:$0xff]
        %v509 = vpack.c.bf16 %v508, %v508
        %v510 = vld [vmem:[%s442] sm:$0xff]
        %v511 = vpack.c.bf16 %v510, %v510
        %v512 = vld [vmem:[#allocation9] sm:$0xf]
        %v513 = vld [vmem:[#allocation9 + $0x4] sm:$0xf]
        %v514 = vld [vmem:[#allocation9 + $0x8] sm:$0xf]
        %v515 = vld [vmem:[#allocation9 + $0xc] sm:$0xf]
        %v516 = vld [vmem:[%s4] sm:$0x1]
        %v518 = vperm.slane %v516, 0
        %v524 = vunpack.c.l.b16 %v512
        %v525 = vunpack.c.l.b16 %v513
        %v526 = vunpack.c.l.b16 %v514
        %v527 = vunpack.c.l.b16 %v515
        %v528 = vpack.c.b16 %v525, %v524
        %v529 = vpack.c.b16 %v527, %v526
        %vm532 = vcmask 261120
        %v534 = vsel %vm532, %v509, 0
        %536 = vmatpush.bf16.msra.mxu0 0
        %537 = vmatpush.bf16.msra.mxu0 0
        %538 = vmatpush.bf16.msra.mxu0 0
        %539 = vmatpush.bf16.msra.mxu0 0
        %540 = vmatpush.bf16.msra.mxu0 0
        %541 = vmatpush.bf16.msra.mxu0 0
        %542 = vmatpush.bf16.msra.mxu0 %v529
        %543 = vmatpush.bf16.msra.mxu0 %v528
        %544 = vmatmul.bf16.gmra.mxu0 %v534
        %v545 = vpop.f32.mrf.mxu0
        %v546 = vadd.f32 %v518, %v545
        %v547 = vpop.f32.mrf.mxu0
        %548 = vdwg.mxu0
        %v549 = vld [vmem:[#allocation11] sm:$0xf]
        %v550 = vld [vmem:[#allocation11 + $0x4] sm:$0xf]
        %v551 = vld [vmem:[#allocation11 + $0x8] sm:$0xf]
        %v552 = vld [vmem:[#allocation11 + $0xc] sm:$0xf]
        %v553 = vld [vmem:[%s6] sm:$0x1]
        %v555 = vperm.slane %v553, 0
        %v561 = vunpack.c.l.b16 %v549
        %v562 = vunpack.c.l.b16 %v550
        %v563 = vunpack.c.l.b16 %v551
        %v564 = vunpack.c.l.b16 %v552
        %v565 = vpack.c.b16 %v562, %v561
        %v566 = vpack.c.b16 %v564, %v563
        %v570 = vsel %vm532, %v511, 0
        %572 = vmatpush.bf16.msra.mxu0 0
        %573 = vmatpush.bf16.msra.mxu0 0
        %574 = vmatpush.bf16.msra.mxu0 0
        %575 = vmatpush.bf16.msra.mxu0 0
        %576 = vmatpush.bf16.msra.mxu0 0
        %577 = vmatpush.bf16.msra.mxu0 0
        %578 = vmatpush.bf16.msra.mxu0 %v566
        %579 = vmatpush.bf16.msra.mxu0 %v565
        %580 = vmatmul.bf16.gmra.mxu0 %v570
        %v581 = vpop.f32.mrf.mxu0
        %v582 = vadd.f32 %v555, %v581
        %v583 = vpop.f32.mrf.mxu0
        %584 = vdwg.mxu0
        %v585 = vld [vmem:[#allocation8] sm:$0xff]
        %v586 = vpack.c.bf16 %v546, %v546
        %v587 = vpack.c.bf16 %v582, %v582
        %vm588 = vcmask 64512
        %v590 = vsel %vm588, %v586, 0
        %v593 = vsel %vm588, %v587, 0
        %595 = vmatpush.bf16.xpose.msra.mxu0 0
        %596 = vmatpush.bf16.xpose.msra.mxu0 0
        %597 = vmatpush.bf16.xpose.msra.mxu0 0
        %598 = vmatpush.bf16.xpose.msra.mxu0 0
        %599 = vmatpush.bf16.xpose.msra.mxu0 0
        %600 = vmatpush.bf16.xpose.msra.mxu0 0
        %601 = vmatpush.bf16.xpose.msra.mxu0 0
        %602 = vmatpush.bf16.xpose.msra.mxu0 %v593
        %603 = vmatmul.bf16.gmra.mxu0 %v590
        %v604 = vpop.f32.mrf.mxu0
        %v605 = vadd.f32 %v585, %v604
        %v606 = vpop.f32.mrf.mxu0
        %607 = vdwg.mxu0
        %v608 = vsel %vm588, %v605, -inf
        %609 = vmax.xlane.f32.xlu0 %v608
        %v610 = vpop.xlane.xlu0 %609
        %v611 = vsub.f32 %v605, %v610
        %v612 = vmul.f32 %v611, 1.442695
        %v613 = vpow.pop %v612
        %v614 = vsel %vm588, %v613, 0.0
        %615 = vadd.xlane.f32.xlu0 %v614
        %v616 = vpop.xlane.xlu0 %615
        %v617 = vrcp.pop %v616
        %v618 = vmul.f32 %v613, %v617
        %v619 = vpack.c.bf16 %v618, %v618
        %621 = vrot.lane.b32.xlu0 %v587, 96
        %v622 = vpop.permute.xlu0 %621
        %v624 = vsel %vm588, %v619, 0
        %vm626 = vcmask 1043456
        %v628 = vsel %vm626, %v622, 0
        %630 = vmatpush.bf16.msra.mxu0 0
        %631 = vmatpush.bf16.msra.mxu0 0
        %632 = vmatpush.bf16.msra.mxu0 0
        %633 = vmatpush.bf16.msra.mxu0 0
        %634 = vmatpush.bf16.msra.mxu0 0
        %635 = vmatpush.bf16.msra.mxu0 0
        %636 = vmatpush.bf16.msra.mxu0 0
        %637 = vmatpush.bf16.msra.mxu0 %v628
        %638 = vmatmul.bf16.gmra.mxu0 %v624
        %v639 = vpop.f32.mrf.mxu0
        %v640 = vadd.f32 0.0, %v639
        %v641 = vpop.f32.mrf.mxu0
        %642 = vdwg.mxu0
        %643 = vst.msk [vmem:[#allocation2] sm:$0xff] %vm588, %v640
        %645 = vrot.lane.b32.xlu0 %v586, 120
        %v646 = vpop.permute.xlu0 %645
        %647 = vrot.lane.b32.xlu0 %v587, 120
        %v648 = vpop.permute.xlu0 %647
        %v650 = vsel %vm588, %v646, 0
        %v653 = vsel %vm588, %v648, 0
        %655 = vmatpush.bf16.xpose.msra.mxu0 0
        %656 = vmatpush.bf16.xpose.msra.mxu0 0
        %657 = vmatpush.bf16.xpose.msra.mxu0 0
        %658 = vmatpush.bf16.xpose.msra.mxu0 0
        %659 = vmatpush.bf16.xpose.msra.mxu0 0
        %660 = vmatpush.bf16.xpose.msra.mxu0 0
        %661 = vmatpush.bf16.xpose.msra.mxu0 0
        %662 = vmatpush.bf16.xpose.msra.mxu0 %v653
        %663 = vmatmul.bf16.gmra.mxu0 %v650
        %v664 = vpop.f32.mrf.mxu0
        %v665 = vadd.f32 %v585, %v664
        %v666 = vpop.f32.mrf.mxu0
        %667 = vdwg.mxu0
        %v668 = vsel %vm588, %v665, -inf
        %669 = vmax.xlane.f32.xlu0 %v668
        %v670 = vpop.xlane.xlu0 %669
        %v671 = vsub.f32 %v665, %v670
        %v672 = vmul.f32 %v671, 1.442695
        %v673 = vpow.pop %v672
        %v674 = vsel %vm588, %v673, 0.0
        %675 = vadd.xlane.f32.xlu0 %v674
        %v676 = vpop.xlane.xlu0 %675
        %v677 = vrcp.pop %v676
        %v678 = vmul.f32 %v673, %v677
        %v679 = vpack.c.bf16 %v678, %v678
        %680 = vrot.lane.b32.xlu0 %v587, 88
        %v681 = vpop.permute.xlu0 %680
        %v683 = vsel %vm588, %v679, 0
        %v686 = vsel %vm626, %v681, 0
        %688 = vmatpush.bf16.msra.mxu0 0
        %689 = vmatpush.bf16.msra.mxu0 0
        %690 = vmatpush.bf16.msra.mxu0 0
        %691 = vmatpush.bf16.msra.mxu0 0
        %692 = vmatpush.bf16.msra.mxu0 0
        %693 = vmatpush.bf16.msra.mxu0 0
        %694 = vmatpush.bf16.msra.mxu0 0
        %695 = vmatpush.bf16.msra.mxu0 %v686
        %696 = vmatmul.bf16.gmra.mxu0 %v683
        %v697 = vpop.f32.mrf.mxu0
        %v698 = vadd.f32 0.0, %v697
        %v699 = vpop.f32.mrf.mxu0
        %700 = vdwg.mxu0
        %702 = vrot.lane.b32.xlu0 %v698, 8
        %v703 = vpop.permute.xlu0 %702
        %vm705 = vcmask 130112
        %706 = vst.msk [vmem:[#allocation2] sm:$0xff] %vm705, %v703
        %707 = vrot.lane.b32.xlu0 %v586, 112
        %v708 = vpop.permute.xlu0 %707
        %709 = vrot.lane.b32.xlu0 %v587, 112
        %v710 = vpop.permute.xlu0 %709
        %v712 = vsel %vm588, %v708, 0
        %v715 = vsel %vm588, %v710, 0
        %717 = vmatpush.bf16.xpose.msra.mxu0 0
        %718 = vmatpush.bf16.xpose.msra.mxu0 0
        %719 = vmatpush.bf16.xpose.msra.mxu0 0
        %720 = vmatpush.bf16.xpose.msra.mxu0 0
        %721 = vmatpush.bf16.xpose.msra.mxu0 0
        %722 = vmatpush.bf16.xpose.msra.mxu0 0
        %723 = vmatpush.bf16.xpose.msra.mxu0 0
        %724 = vmatpush.bf16.xpose.msra.mxu0 %v715
        %725 = vmatmul.bf16.gmra.mxu0 %v712
        %v726 = vpop.f32.mrf.mxu0
        %v727 = vadd.f32 %v585, %v726
        %v728 = vpop.f32.mrf.mxu0
        %729 = vdwg.mxu0
        %v730 = vsel %vm588, %v727, -inf
        %731 = vmax.xlane.f32.xlu0 %v730
        %v732 = vpop.xlane.xlu0 %731
        %v733 = vsub.f32 %v727, %v732
        %v734 = vmul.f32 %v733, 1.442695
        %v735 = vpow.pop %v734
        %v736 = vsel %vm588, %v735, 0.0
        %737 = vadd.xlane.f32.xlu0 %v736
        %v738 = vpop.xlane.xlu0 %737
        %v739 = vrcp.pop %v738
        %v740 = vmul.f32 %v735, %v739
        %v741 = vpack.c.bf16 %v740, %v740
        %742 = vrot.lane.b32.xlu0 %v587, 80
        %v743 = vpop.permute.xlu0 %742
        %v745 = vsel %vm588, %v741, 0
        %v748 = vsel %vm626, %v743, 0
        %750 = vmatpush.bf16.msra.mxu0 0
        %751 = vmatpush.bf16.msra.mxu0 0
        %752 = vmatpush.bf16.msra.mxu0 0
        %753 = vmatpush.bf16.msra.mxu0 0
        %754 = vmatpush.bf16.msra.mxu0 0
        %755 = vmatpush.bf16.msra.mxu0 0
        %756 = vmatpush.bf16.msra.mxu0 0
        %757 = vmatpush.bf16.msra.mxu0 %v748
        %758 = vmatmul.bf16.gmra.mxu0 %v745
        %v759 = vpop.f32.mrf.mxu0
        %v760 = vadd.f32 0.0, %v759
        %v761 = vpop.f32.mrf.mxu0
        %762 = vdwg.mxu0
        %764 = vrot.lane.b32.xlu0 %v760, 16
        %v765 = vpop.permute.xlu0 %764
        %vm767 = vcmask 195712
        %768 = vst.msk [vmem:[#allocation2] sm:$0xff] %vm767, %v765
        %769 = vrot.lane.b32.xlu0 %v586, 104
        %v770 = vpop.permute.xlu0 %769
        %771 = vrot.lane.b32.xlu0 %v587, 104
        %v772 = vpop.permute.xlu0 %771
        %v774 = vsel %vm588, %v770, 0
        %v777 = vsel %vm588, %v772, 0
        %779 = vmatpush.bf16.xpose.msra.mxu0 0
        %780 = vmatpush.bf16.xpose.msra.mxu0 0
        %781 = vmatpush.bf16.xpose.msra.mxu0 0
        %782 = vmatpush.bf16.xpose.msra.mxu0 0
        %783 = vmatpush.bf16.xpose.msra.mxu0 0
        %784 = vmatpush.bf16.xpose.msra.mxu0 0
        %785 = vmatpush.bf16.xpose.msra.mxu0 0
        %786 = vmatpush.bf16.xpose.msra.mxu0 %v777
        %787 = vmatmul.bf16.gmra.mxu0 %v774
        %v788 = vpop.f32.mrf.mxu0
        %v789 = vadd.f32 %v585, %v788
        %v790 = vpop.f32.mrf.mxu0
        %791 = vdwg.mxu0
        %v792 = vsel %vm588, %v789, -inf
        %793 = vmax.xlane.f32.xlu0 %v792
        %v794 = vpop.xlane.xlu0 %793
        %v795 = vsub.f32 %v789, %v794
        %v796 = vmul.f32 %v795, 1.442695
        %v797 = vpow.pop %v796
        %v798 = vsel %vm588, %v797, 0.0
        %799 = vadd.xlane.f32.xlu0 %v798
        %v800 = vpop.xlane.xlu0 %799
        %v801 = vrcp.pop %v800
        %v802 = vmul.f32 %v797, %v801
        %v803 = vpack.c.bf16 %v802, %v802
        %804 = vrot.lane.b32.xlu0 %v587, 72
        %v805 = vpop.permute.xlu0 %804
        %v807 = vsel %vm588, %v803, 0
        %v810 = vsel %vm626, %v805, 0
        %812 = vmatpush.bf16.msra.mxu0 0
        %813 = vmatpush.bf16.msra.mxu0 0
        %814 = vmatpush.bf16.msra.mxu0 0
        %815 = vmatpush.bf16.msra.mxu0 0
        %816 = vmatpush.bf16.msra.mxu0 0
        %817 = vmatpush.bf16.msra.mxu0 0
        %818 = vmatpush.bf16.msra.mxu0 0
        %819 = vmatpush.bf16.msra.mxu0 %v810
        %820 = vmatmul.bf16.gmra.mxu0 %v807
        %v821 = vpop.f32.mrf.mxu0
        %v822 = vadd.f32 0.0, %v821
        %v823 = vpop.f32.mrf.mxu0
        %824 = vdwg.mxu0
        %826 = vrot.lane.b32.xlu0 %v822, 24
        %v827 = vpop.permute.xlu0 %826
        %vm829 = vcmask 261312
        %830 = vst.msk [vmem:[#allocation2] sm:$0xff] %vm829, %v827
        %v831 = vld [vmem:[#allocation2] sm:$0xff]
        %v832 = vpack.c.bf16 %v831, %v831
        %v833 = vld [vmem:[#allocation12] sm:$0xf]
        %v834 = vld [vmem:[#allocation12 + $0x4] sm:$0xf]
        %v835 = vld [vmem:[#allocation12 + $0x8] sm:$0xf]
        %v836 = vld [vmem:[#allocation12 + $0xc] sm:$0xf]
        %v837 = vld [vmem:[%s8] sm:$0x1]
        %v839 = vperm.slane %v837, 0
        %v845 = vunpack.c.l.b16 %v833
        %v846 = vunpack.c.l.b16 %v834
        %v847 = vunpack.c.l.b16 %v835
        %v848 = vunpack.c.l.b16 %v836
        %v849 = vpack.c.b16 %v846, %v845
        %v850 = vpack.c.b16 %v848, %v847
        %v854 = vsel %vm532, %v832, 0
        %856 = vmatpush.bf16.msra.mxu0 0
        %857 = vmatpush.bf16.msra.mxu0 0
        %858 = vmatpush.bf16.msra.mxu0 0
        %859 = vmatpush.bf16.msra.mxu0 0
        %860 = vmatpush.bf16.msra.mxu0 0
        %861 = vmatpush.bf16.msra.mxu0 0
        %862 = vmatpush.bf16.msra.mxu0 %v850
        %863 = vmatpush.bf16.msra.mxu0 %v849
        %864 = vmatmul.bf16.gmra.mxu0 %v854
        %v865 = vpop.f32.mrf.mxu0
        %v866 = vadd.f32 %v839, %v865
        %v867 = vpop.f32.mrf.mxu0
        %868 = vdwg.mxu0
        %v869 = vadd.f32 %v866, %v508
        %v870 = vsel %vm532, %v869, 0.0
        %871 = vadd.xlane.f32.xlu0 %v870
        %v872 = vpop.xlane.xlu0 %871
        %v873 = vrcp.pop 32.0
        %v874 = vmul.f32 32.0, %v873
        %v875 = vsub.f32 1.0, %v874
        %v876 = vmul.f32 %v873, %v875
        %v877 = vadd.f32 %v873, %v876
        %vm878 = vweird.f32 %v873
        %v879 = vsel %vm878, %v873, %v877
        %v880 = vmul.f32 %v872, %v879
        %v881 = vsub.f32 %v869, %v880
        %v882 = vmul.f32 %v881, %v881
        %v883 = vsel %vm532, %v882, 0.0
        %884 = vadd.xlane.f32.xlu0 %v883
        %v885 = vpop.xlane.xlu0 %884
        %v886 = vmul.f32 %v885, %v879
        %v887 = vadd.f32 %v886, 1e-06
        %v888 = vrsqrt.pop %v887
        %v889 = vmul.f32 %v888, %v887
        %v890 = vmul.f32 %v889, %v888
        %v891 = vmul.f32 0.5, %v890
        %v892 = vsub.f32 1.5, %v891
        %v893 = vmul.f32 %v888, %v892
        %vm894 = vweird.f32 %v887
        %vm895 = vweird.f32 %v888
        %vm896 = vmor %vm894, %vm895
        %v897 = vsel %vm896, %v888, %v893
        %v898 = vmul.f32 %v881, %v897
        %v899 = vld [vmem:[%s9] sm:$0x1]
        %v901 = vperm.slane %v899, 0
        %v903 = vmul.f32 %v898, %v901
        %v904 = vld [vmem:[%s10] sm:$0x1]
        %v906 = vperm.slane %v904, 0
        %v908 = vadd.f32 %v903, %v906
        %909 = vst.msk [vmem:[%s506] sm:$0xff] %vm532, %v908
        %s910 = sand.u32 %s282, 1
        %s911 = scalar_lea.sflag [#allocation5], %s910
        %s912 = sand.u32 %s282, 1
        %s913 = smul.addr %s912, 8
        %s914 = scalar_lea.vmem [#allocation14], %s913
        // Predicated region
        $region89: #{tpu_custom_call.1} parent=63 // pred_check
          %p915 = pneg %p292
        $region90: #{tpu_custom_call.1} parent=63 // pred_check_branch
          %917 = sbr.rel (%p915) target = $region92
        $region91: #{tpu_custom_call.1} parent=63 // pred_region
          %919 = vsyncadd %s911, 0
          %s920 = smul.addr %s33, 8
          %s921 = scalar_lea.hbm %s11, %s920
          %s923 = sshll.u32 %s914, 4
          %s924 = int_to_ptr.vmem [resolvable:$true] %s923
          %s925 = sshll.u32 %s921, 4
          %s926 = int_to_ptr.hbm [resolvable:$true] %s925
          %928 = dma.vmem_to_hbm [thread:$0]  %s924, 128, %s926, %s911
        $region92: #{tpu_custom_call.1} parent=63 // pred_fallthru
          _
      $region64: #{tpu_custom_call.1} parent=5 // pred_fallthru
        _
      %p929 = scmp.le.s32.totalorder 2, %s28
      // Predicated region
      $region93: #{tpu_custom_call.1} parent=5 // pred_check
        %p930 = pneg %p929
      $region94: #{tpu_custom_call.1} parent=5 // pred_check_branch
        %932 = sbr.rel (%p930) target = $region96
      $region95: #{tpu_custom_call.1} parent=5 // pred_region
        %s933 = ssub.s32 %s28, 2
        // Predicated region
        $region97: #{tpu_custom_call.1} parent=95 // pred_check
          %p934 = pneg %p298
        $region98: #{tpu_custom_call.1} parent=95 // pred_check_branch
          %936 = sbr.rel (%p934) target = $region100
        $region99: #{tpu_custom_call.1} parent=95 // pred_region
          %s937 = sand.u32 %s283, 1
          %s938 = scalar_lea.sflag [#allocation5], %s937
          %s939 = sand.u32 %s283, 1
          %s940 = smul.addr %s939, 8
          %s941 = scalar_lea.vmem [#allocation14], %s940
          %943 = dma.done %s938, 128
        $region100: #{tpu_custom_call.1} parent=95 // pred_fallthru
          _
      $region96: #{tpu_custom_call.1} parent=5 // pred_fallthru
        _
    $region6: #{tpu_custom_call.1} parent=1 // loop_footer
      %s32 = sadd.s32 1, %s28
    $region7: #{tpu_custom_call.1} parent=1 // loop_footer_branch
      %27 = sbr.rel target = $region3
    $region8: #{tpu_custom_call.1} parent=1 // loop_exit
      _
    %944 = vsyncpa [#allocation4], 1
    %s945 = scalar_lea.sflag [#allocation4], 1
    %946 = vsyncpa %s945, 1
    %947 = vsyncpa [#allocation7], 1
    %s948 = scalar_lea.sflag [#allocation7], 1
    %949 = vsyncpa %s948, 1
    %950 = vsyncpa [#allocation10], 1
    %951 = vsyncpa [#allocation13], 1
    %952 = vsyncpa [#allocation5], 1
    %s953 = scalar_lea.sflag [#allocation5], 1
    %954 = vsyncpa %s953, 1

</llo_original>
